<compile_context>
chip_gen: v5e
topology: v5e:2x2
jax: 0.10.0
libtpu: 0.0.40
codegen_flags: <defaults>
</compile_context>

<pallas_src>
import functools

import jax
import jax.numpy as jnp
from jax.experimental import pallas as pl
from jax.experimental.pallas import tpu as pltpu

LANE = 128      # lane width; also the fc1 hidden size (exactly 128)
SUBLANE = 8     # f32 sublane count


def _round_up(n, m):
    return ((n + m - 1) // m) * m


def policy_kernel(x_ref, w1_ref, w2_ref, out_ref, *, action_dim):
    # x_ref  : (B_pad, K_pad)      rows = batch (zero-padded), cols = [features | 1 | 0-pad]
    # w1_ref : (K_pad, 128)        rows = [w1 ; b1 ; 0-pad]   (fc1 bias folded in)
    # w2_ref : (136, 128)          rows 0:128 = w2 (cols >= A are zero), row 128 = b2
    # out_ref: (2, B_pad, 128)     [0] = logits (lane-padded), [1] = softmax probs
    x = x_ref[...]

    # fc1 + bias (folded) + ReLU — one small MXU pass.
    h = jnp.maximum(
        jnp.dot(x, w1_ref[...], preferred_element_type=jnp.float32), 0.0)

    # fc2 + bias (folded as the extra row of the packed weight).
    logits = (jnp.dot(h, w2_ref[0:LANE, :], preferred_element_type=jnp.float32)
              + w2_ref[LANE:LANE + 1, :])                       # (B_pad, 128)

    # Columns >= action_dim were produced by zero weights/bias -> exactly 0;
    # mask them out of the softmax so they contribute nothing.
    col = jax.lax.broadcasted_iota(jnp.int32, logits.shape, 1)
    masked = jnp.where(col < action_dim, logits, -jnp.inf)
    m = jnp.max(masked, axis=-1, keepdims=True)
    e = jnp.exp(masked - m)                                     # exp(-inf) == 0 on pad lanes
    denom = jnp.sum(e, axis=-1, keepdims=True)
    r = pl.reciprocal(denom, approx=True)                       # EUP vrcp (free slot)
    r = r * (2.0 - denom * r)                                   # one Newton step -> ~f32 exact
    probs = e * r

    # Two aligned, full-width (lane-dense) stores into the single packed output.
    out_ref[0] = logits
    out_ref[1] = probs


def policy_forward(x, w1, b1, w2, b2):
    """x: (B, state_dim); w1: (state_dim, 128); b1: (128,); w2: (128, A); b2: (A,).

    Weights are stored (in, out) (PyTorch nn.Linear weight transposed).
    Returns (logits, probs), each (B, A) float32 — the Categorical's parameters.
    """
    B, K = x.shape
    H, A = w2.shape
    assert H == LANE, "fc1 hidden size is fixed at 128"

    B_pad = _round_up(max(B, 1), SUBLANE)          # pad batch to a sublane multiple
    K_pad = _round_up(K + 1, SUBLANE)              # +1 for the folded fc1 bias column

    # x_aug = [x | 1 | 0-pad], batch rows zero-padded.
    x_aug = jnp.zeros((B_pad, K_pad), jnp.float32)
    x_aug = x_aug.at[:B, :K].set(x.astype(jnp.float32))
    x_aug = x_aug.at[:, K].set(1.0)

    # w1_aug = [w1 ; b1 ; 0-pad]  -> (K_pad, 128)
    w1_aug = jnp.zeros((K_pad, H), jnp.float32)
    w1_aug = w1_aug.at[:K, :].set(w1.astype(jnp.float32))
    w1_aug = w1_aug.at[K, :].set(b1.astype(jnp.float32))

    # w2_pack: rows 0:128 = w2 (lane-padded to 128 output cols), row 128 = b2.
    w2_pack = jnp.zeros((H + SUBLANE, LANE), jnp.float32)
    w2_pack = w2_pack.at[:H, :A].set(w2.astype(jnp.float32))
    w2_pack = w2_pack.at[H, :A].set(b2.astype(jnp.float32))

    vmem = pltpu.MemorySpace.VMEM
    full = lambda shape: pl.BlockSpec(
        shape, lambda: (0,) * len(shape), memory_space=vmem)

    bytes_in = 4 * (x_aug.size + w1_aug.size + w2_pack.size)
    bytes_out = 4 * 2 * B_pad * LANE
    cost = pl.CostEstimate(
        flops=2 * B_pad * (K_pad * H + H * LANE),
        transcendentals=B_pad * LANE + B_pad,
        bytes_accessed=bytes_in + bytes_out,
    )

    out = pl.pallas_call(
        functools.partial(policy_kernel, action_dim=A),
        out_shape=jax.ShapeDtypeStruct((2, B_pad, LANE), jnp.float32),
        in_specs=[full(x_aug.shape), full(w1_aug.shape), full(w2_pack.shape)],
        out_specs=pl.BlockSpec((2, B_pad, LANE), lambda: (0, 0, 0),
                               memory_space=vmem),
        cost_estimate=cost,
    )(x_aug, w1_aug, w2_pack)

    logits = out[0, :B, :A]
    probs = out[1, :B, :A]
    return logits, probs


def init_linear_params(key, in_features, out_features):
    """Deterministic PyTorch-style default init: U(-1/sqrt(in), 1/sqrt(in))."""
    kw, kb = jax.random.split(key)
    bound = 1.0 / jnp.sqrt(jnp.float32(in_features))
    # PyTorch stores weight as (out, in); we keep (in, out) so the kernel does x @ W.
    w = jax.random.uniform(kw, (in_features, out_features), jnp.float32, -bound, bound)
    b = jax.random.uniform(kb, (out_features,), jnp.float32, -bound, bound)
    return w, b


if __name__ == "__main__":
    # CartPole-ish small shapes: state_dim=4, action_dim=2, hidden=128, batch=2.
    state_dim, action_dim, hidden, batch = 4, 2, 128, 2

    root = jax.random.PRNGKey(0)
    k_x, k_fc1, k_fc2 = jax.random.split(root, 3)

    x = jax.random.normal(k_x, (batch, state_dim), jnp.float32)
    w1, b1 = init_linear_params(k_fc1, state_dim, hidden)
    w2, b2 = init_linear_params(k_fc2, hidden, action_dim)

    logits, probs = policy_forward(x, w1, b1, w2, b2)
    jax.block_until_ready((logits, probs))

    # Pure-JAX reference check of the fused kernel.
    h_ref = jnp.maximum(x @ w1 + b1, 0.0)
    logits_ref = h_ref @ w2 + b2
    probs_ref = jax.nn.softmax(logits_ref, axis=-1)
    assert logits.shape == (batch, action_dim) and probs.shape == (batch, action_dim)
    assert jnp.allclose(logits, logits_ref, atol=1e-5, rtol=1e-5)
    assert jnp.allclose(probs, probs_ref, atol=1e-5, rtol=1e-5)
    assert jnp.allclose(jnp.sum(probs, axis=-1), 1.0, atol=1e-5)

    print("KERNEL_OK")
</pallas_src>

<mosaic_0001>
module attributes {stable_mosaic.version = 11 : i64} {
  func.func @policy_kernel(%arg0: memref<8x8xf32, #tpu.memory_space<vmem>>, %arg1: memref<8x128xf32, #tpu.memory_space<vmem>>, %arg2: memref<136x128xf32, #tpu.memory_space<vmem>>, %arg3: memref<2x8x128xf32, #tpu.memory_space<vmem>>) attributes {dimension_semantics = [], scalar_prefetch = 0 : i64, scratch_operands = 0 : i64, tpu.core_type = #tpu.core_type<tc>} {
    %c0 = arith.constant 0 : index
    %c0_0 = arith.constant 0 : index
    %0 = vector.load %arg0[%c0, %c0_0] : memref<8x8xf32, #tpu.memory_space<vmem>>, vector<8x8xf32>
    %c0_1 = arith.constant 0 : index
    %c0_2 = arith.constant 0 : index
    %1 = vector.load %arg1[%c0_1, %c0_2] : memref<8x128xf32, #tpu.memory_space<vmem>>, vector<8x128xf32>
    %cst = arith.constant dense<0.000000e+00> : vector<8x128xf32>
    %2 = tpu.matmul %0, %1, %cst {dimension_numbers = #tpu.dot_dimension_numbers<[1], [0], [0], [1], [0, 0, 1, 1], [], []>} : vector<8x8xf32>, vector<8x128xf32>, vector<8x128xf32> -> vector<8x128xf32>
    %cst_3 = arith.constant 0.000000e+00 : f32
    %3 = vector.broadcast %cst_3 : f32 to vector<8x128xf32>
    %4 = arith.maximumf %2, %3 : vector<8x128xf32>
    %c0_4 = arith.constant 0 : index
    %c0_5 = arith.constant 0 : index
    %5 = vector.load %arg2[%c0_4, %c0_5] : memref<136x128xf32, #tpu.memory_space<vmem>>, vector<128x128xf32>
    %cst_6 = arith.constant dense<0.000000e+00> : vector<8x128xf32>
    %6 = tpu.matmul %4, %5, %cst_6 {dimension_numbers = #tpu.dot_dimension_numbers<[1], [0], [0], [1], [0, 0, 1, 1], [], []>} : vector<8x128xf32>, vector<128x128xf32>, vector<8x128xf32> -> vector<8x128xf32>
    %c128 = arith.constant 128 : index
    %c0_7 = arith.constant 0 : index
    %7 = vector.load %arg2[%c128, %c0_7] : memref<136x128xf32, #tpu.memory_space<vmem>>, vector<1x128xf32>
    %8 = vector.broadcast %7 : vector<1x128xf32> to vector<8x128xf32>
    %9 = arith.addf %6, %8 : vector<8x128xf32>
    %10 = tpu.iota {dimensions = array<i32: 1>} : vector<8x128xi32>
    %c2_i32 = arith.constant 2 : i32
    %11 = vector.broadcast %c2_i32 : i32 to vector<8x128xi32>
    %12 = arith.cmpi slt, %10, %11 : vector<8x128xi32>
    %cst_8 = arith.constant 0xFF800000 : f32
    %13 = vector.broadcast %cst_8 : f32 to vector<8x128xf32>
    %14 = arith.select %12, %9, %13 : vector<8x128xi1>, vector<8x128xf32>
    %cst_9 = arith.constant dense<0xFF800000> : vector<8xf32>
    %15 = vector.multi_reduction <maximumf>, %14, %cst_9 [1] : vector<8x128xf32> to vector<8xf32>
    %16 = vector.shape_cast %15 : vector<8xf32> to vector<8x1xf32>
    %17 = vector.broadcast %16 : vector<8x1xf32> to vector<8x128xf32>
    %18 = arith.subf %14, %17 : vector<8x128xf32>
    %19 = math.exp %18 : vector<8x128xf32>
    %cst_10 = arith.constant dense<0.000000e+00> : vector<8xf32>
    %20 = vector.multi_reduction <add>, %19, %cst_10 [1] : vector<8x128xf32> to vector<8xf32>
    %21 = vector.shape_cast %20 : vector<8xf32> to vector<8x1xf32>
    %22 = tpu.reciprocal %21 {approx = true} : vector<8x1xf32> -> vector<8x1xf32>
    %23 = arith.mulf %21, %22 : vector<8x1xf32>
    %cst_11 = arith.constant 2.000000e+00 : f32
    %24 = vector.broadcast %cst_11 : f32 to vector<8x1xf32>
    %25 = arith.subf %24, %23 : vector<8x1xf32>
    %26 = arith.mulf %22, %25 : vector<8x1xf32>
    %27 = vector.broadcast %26 : vector<8x1xf32> to vector<8x128xf32>
    %28 = arith.mulf %19, %27 : vector<8x128xf32>
    %c0_12 = arith.constant 0 : index
    %c0_13 = arith.constant 0 : index
    %c0_14 = arith.constant 0 : index
    %29 = vector.load %arg3[%c0_12, %c0_13, %c0_14] : memref<2x8x128xf32, #tpu.memory_space<vmem>>, vector<1x8x128xf32>
    %30 = vector.shape_cast %29 : vector<1x8x128xf32> to vector<8x128xf32>
    %31 = vector.shape_cast %9 : vector<8x128xf32> to vector<1x8x128xf32>
    tpu.vector_store %arg3[%c0_12, %c0_13, %c0_14], %31 {strides = array<i32>} : memref<2x8x128xf32, #tpu.memory_space<vmem>>, vector<1x8x128xf32>,
    %c1 = arith.constant 1 : index
    %c0_15 = arith.constant 0 : index
    %c0_16 = arith.constant 0 : index
    %32 = vector.load %arg3[%c1, %c0_15, %c0_16] : memref<2x8x128xf32, #tpu.memory_space<vmem>>, vector<1x8x128xf32>
    %33 = vector.shape_cast %32 : vector<1x8x128xf32> to vector<8x128xf32>
    %34 = vector.shape_cast %28 : vector<8x128xf32> to vector<1x8x128xf32>
    tpu.vector_store %arg3[%c1, %c0_15, %c0_16], %34 {strides = array<i32>} : memref<2x8x128xf32, #tpu.memory_space<vmem>>, vector<1x8x128xf32>,
    return
  }
}

</mosaic_0001>

<llo_original>
// kernel: tpu_custom_call.1
$region0: #{tpu_custom_call.1}
  #allocation0 [shape = 'u32[]', space=smem, size = 0x4, offset = 0x4, fixed_abs, tag = 'smem constant byte address 0x4 - core index']
  #allocation1 [shape = 'u32[72,128]{1,0:T(1,128)}', space=vmem, size = 0x9000, scoped, tag = 'internal scratch']
  %s0 = inlined_call_operand.hbm [shape: f32[8,8], index: 0, kind: input, shape index: {}]
  %s1 = inlined_call_operand.hbm [shape: f32[8,128], index: 1, kind: input, shape index: {}]
  %s2 = inlined_call_operand.hbm [shape: f32[136,128], index: 2, kind: input, shape index: {}]
  %s3 = inlined_call_operand.hbm [shape: f32[2,8,128], index: 3, kind: output, shape index: {}]
  %s4 = sld [smem:[#allocation0]]
  $region34: #{tpu_custom_call.1} parent=0
    _
  %s6 = ssub.s32 1, %s4
  %s7 = scalar_select 0, %s6, %s4
  $region1: #{tpu_custom_call.1} parent=0
    #allocation2 [shape = 'u8[4096]{0}', space=vmem, size = 0x1000, scoped, tag = 'input window, operand 0, single buffered']
    #allocation3 [shape = 's32[1]{0}', space=sflag, size = 0x4, scoped, tag = 'scoped memory for tpu_custom_call.1']
    #allocation4 [shape = 's32[1]{0}', space=sflag, size = 0x4, scoped, tag = 'scoped memory for tpu_custom_call.1']
    #allocation5 [shape = 'u8[4096]{0}', space=vmem, size = 0x1000, scoped, tag = 'input window, operand 1, single buffered']
    #allocation6 [shape = 's32[1]{0}', space=sflag, size = 0x4, scoped, tag = 'scoped memory for tpu_custom_call.1']
    #allocation7 [shape = 'u8[69632]{0}', space=vmem, size = 0x11000, scoped, tag = 'input window, operand 2, single buffered']
    #allocation8 [shape = 'u8[8192]{0}', space=vmem, size = 0x2000, scoped, tag = 'output window, operand 0, single buffered']
    %8 = vsyncpa [#allocation3], 0
    %9 = vsyncpa [#allocation6], 0
    %10 = vsyncpa [#allocation4], 0
    // Predicated region
    $region2: #{tpu_custom_call.1} parent=1 // pred_check
      _
    $region3: #{tpu_custom_call.1} parent=1 // pred_check_branch
      %12 = sbr.rel (0) target = $region5
    $region4: #{tpu_custom_call.1} parent=1 // pred_region
      %14 = vsyncadd [#allocation3], 0
      %s16 = sshll.u32 %s0, 4
      %s17 = int_to_ptr.hbm [resolvable:$true] %s16
      %s18 = sshll.u32 [#allocation2], 4
      %s19 = int_to_ptr.vmem [resolvable:$true] %s18
      %21 = dma.hbm_to_vmem [thread:$0]  %s17, 128, %s19, [#allocation3]
    $region5: #{tpu_custom_call.1} parent=1 // pred_fallthru
      _
    // Predicated region
    $region6: #{tpu_custom_call.1} parent=1 // pred_check
      _
    $region7: #{tpu_custom_call.1} parent=1 // pred_check_branch
      %23 = sbr.rel (0) target = $region9
    $region8: #{tpu_custom_call.1} parent=1 // pred_region
      %25 = vsyncadd [#allocation6], 0
      %s27 = sshll.u32 %s1, 4
      %s28 = int_to_ptr.hbm [resolvable:$true] %s27
      %s29 = sshll.u32 [#allocation5], 4
      %s30 = int_to_ptr.vmem [resolvable:$true] %s29
      %32 = dma.hbm_to_vmem [thread:$0]  %s28, 128, %s30, [#allocation6]
    $region9: #{tpu_custom_call.1} parent=1 // pred_fallthru
      _
    // Predicated region
    $region10: #{tpu_custom_call.1} parent=1 // pred_check
      _
    $region11: #{tpu_custom_call.1} parent=1 // pred_check_branch
      %34 = sbr.rel (0) target = $region13
    $region12: #{tpu_custom_call.1} parent=1 // pred_region
      %36 = vsyncadd [#allocation6], 0
      %s37 = sshll.u32 %s2, 4
      %s38 = int_to_ptr.hbm [resolvable:$true] %s37
      %s39 = sshll.u32 [#allocation7], 4
      %s40 = int_to_ptr.vmem [resolvable:$true] %s39
      %45 = dma.hbm_to_vmem [thread:$0]  %s38, 2176, %s40, [#allocation6], 128, 128, 8
    $region13: #{tpu_custom_call.1} parent=1 // pred_fallthru
      _
    // Predicated region
    $region14: #{tpu_custom_call.1} parent=1 // pred_check
      _
    $region15: #{tpu_custom_call.1} parent=1 // pred_check_branch
      %47 = sbr.rel (0) target = $region17
    $region16: #{tpu_custom_call.1} parent=1 // pred_region
      %49 = dma.done [#allocation3], 128
    $region17: #{tpu_custom_call.1} parent=1 // pred_fallthru
      _
    // Predicated region
    $region18: #{tpu_custom_call.1} parent=1 // pred_check
      _
    $region19: #{tpu_custom_call.1} parent=1 // pred_check_branch
      %51 = sbr.rel (0) target = $region21
    $region20: #{tpu_custom_call.1} parent=1 // pred_region
      %53 = dma.done [#allocation6], 128
    $region21: #{tpu_custom_call.1} parent=1 // pred_fallthru
      _
    // Predicated region
    $region22: #{tpu_custom_call.1} parent=1 // pred_check
      _
    $region23: #{tpu_custom_call.1} parent=1 // pred_check_branch
      %55 = sbr.rel (0) target = $region25
    $region24: #{tpu_custom_call.1} parent=1 // pred_region
      %57 = dma.done [#allocation6], 2176
    $region25: #{tpu_custom_call.1} parent=1 // pred_fallthru
      _
    %v58 = vld [vmem:[#allocation2] sm:$0xff]
    %v59 = vld [vmem:[#allocation5] sm:$0xff]
    %vm60 = vcmask 64512
    %v62 = vsel %vm60, %v58, 0
    %64 = vmatpush.msra.mxu0 0.0
    %65 = vmatpush.msra.mxu0 0.0
    %66 = vmatpush.msra.mxu0 0.0
    %67 = vmatpush.msra.mxu0 0.0
    %68 = vmatpush.msra.mxu0 0.0
    %69 = vmatpush.msra.mxu0 0.0
    %70 = vmatpush.msra.mxu0 0.0
    %71 = vmatpush.msra.mxu0 0.0
    %72 = vmatpush.msra.mxu0 0.0
    %73 = vmatpush.msra.mxu0 0.0
    %74 = vmatpush.msra.mxu0 0.0
    %75 = vmatpush.msra.mxu0 0.0
    %76 = vmatpush.msra.mxu0 0.0
    %77 = vmatpush.msra.mxu0 0.0
    %78 = vmatpush.msra.mxu0 0.0
    %79 = vmatpush.msra.mxu0 %v59
    %80 = vmatmul.f32.gmra.mxu0 %v62
    %v81 = vpop.f32.mrf.mxu0
    %v82 = vadd.f32 0.0, %v81
    %83 = vdwg.mxu0
    %v84 = vmax.f32 %v82, 0.0
    %v85 = vld [vmem:[#allocation7] sm:$0xff]
    %v86 = vld [vmem:[#allocation7 + $0x8] sm:$0xff]
    %v87 = vld [vmem:[#allocation7 + $0x10] sm:$0xff]
    %v88 = vld [vmem:[#allocation7 + $0x18] sm:$0xff]
    %v89 = vld [vmem:[#allocation7 + $0x20] sm:$0xff]
    %v90 = vld [vmem:[#allocation7 + $0x28] sm:$0xff]
    %v91 = vld [vmem:[#allocation7 + $0x30] sm:$0xff]
    %v92 = vld [vmem:[#allocation7 + $0x38] sm:$0xff]
    %v93 = vld [vmem:[#allocation7 + $0x40] sm:$0xff]
    %v94 = vld [vmem:[#allocation7 + $0x48] sm:$0xff]
    %v95 = vld [vmem:[#allocation7 + $0x50] sm:$0xff]
    %v96 = vld [vmem:[#allocation7 + $0x58] sm:$0xff]
    %v97 = vld [vmem:[#allocation7 + $0x60] sm:$0xff]
    %v98 = vld [vmem:[#allocation7 + $0x68] sm:$0xff]
    %v99 = vld [vmem:[#allocation7 + $0x70] sm:$0xff]
    %v100 = vld [vmem:[#allocation7 + $0x78] sm:$0xff]
    %v101 = vld [vmem:[#allocation7 + $0x80] sm:$0x1]
    %v102 = vperm.slane %v101, 0
    %103 = vmatpush.msra.mxu0 %v100
    %104 = vmatpush.msra.mxu0 %v99
    %105 = vmatpush.msra.mxu0 %v98
    %106 = vmatpush.msra.mxu0 %v97
    %107 = vmatpush.msra.mxu0 %v96
    %108 = vmatpush.msra.mxu0 %v95
    %109 = vmatpush.msra.mxu0 %v94
    %110 = vmatpush.msra.mxu0 %v93
    %111 = vmatpush.msra.mxu0 %v92
    %112 = vmatpush.msra.mxu0 %v91
    %113 = vmatpush.msra.mxu0 %v90
    %114 = vmatpush.msra.mxu0 %v89
    %115 = vmatpush.msra.mxu0 %v88
    %116 = vmatpush.msra.mxu0 %v87
    %117 = vmatpush.msra.mxu0 %v86
    %118 = vmatpush.msra.mxu0 %v85
    %119 = vmatmul.f32.gmra.mxu0 %v84
    %v120 = vpop.f32.mrf.mxu0
    %v121 = vadd.f32 %v102, %v120
    %122 = vdwg.mxu0
    %v123 = vlaneseq
    %v124 = vand.u32 %v123, 127
    %vm125 = vcmp.lt.s32.totalorder %v124, 2
    %v126 = vsel %vm125, %v121, -inf
    %127 = vmax.xlane.f32.xlu0 %v126
    %v128 = vpop.xlane.xlu0 %127
    %v129 = vsub.f32 %v126, %v128
    %v130 = vmul.f32 %v129, 1.442695
    %v131 = vpow.pop %v130
    %132 = vadd.xlane.f32.xlu0 %v131
    %v133 = vpop.xlane.xlu0 %132
    %v134 = vrcp.pop %v133
    %v135 = vmul.f32 %v133, %v134
    %v136 = vsub.f32 2.0, %v135
    %v137 = vmul.f32 %v134, %v136
    %v138 = vmul.f32 %v131, %v137
    %139 = vst [vmem:[#allocation8] sm:$0xff] %v121
    %s140 = scalar_lea.vmem [#allocation8], 8
    %141 = vst [vmem:[%s140] sm:$0xff] %v138
    // Predicated region
    $region26: #{tpu_custom_call.1} parent=1 // pred_check
      _
    $region27: #{tpu_custom_call.1} parent=1 // pred_check_branch
      %143 = sbr.rel (0) target = $region29
    $region28: #{tpu_custom_call.1} parent=1 // pred_region
      %145 = vsyncadd [#allocation4], 0
      %s146 = sshll.u32 [#allocation8], 4
      %s147 = int_to_ptr.vmem [resolvable:$true] %s146
      %s148 = sshll.u32 %s3, 4
      %s149 = int_to_ptr.hbm [resolvable:$true] %s148
      %154 = dma.vmem_to_hbm [thread:$0]  %s147, 256, %s149, [#allocation4], 128, 128, 8
    $region29: #{tpu_custom_call.1} parent=1 // pred_fallthru
      _
    // Predicated region
    $region30: #{tpu_custom_call.1} parent=1 // pred_check
      _
    $region31: #{tpu_custom_call.1} parent=1 // pred_check_branch
      %156 = sbr.rel (0) target = $region33
    $region32: #{tpu_custom_call.1} parent=1 // pred_region
      %158 = dma.done [#allocation4], 256
    $region33: #{tpu_custom_call.1} parent=1 // pred_fallthru
      _
    %159 = vsyncpa [#allocation3], 1
    %160 = vsyncpa [#allocation6], 1
    %161 = vsyncpa [#allocation4], 1

</llo_original>
